<compile_context>
chip_gen: v6e
topology: v6e:2x2x1
jax: 0.10.0
libtpu: 0.0.40
codegen_flags: <defaults>
</compile_context>

<pallas_src>
from functools import partial

import jax
import jax.numpy as jnp
from jax.experimental import pallas as pl
from jax.experimental.pallas import tpu as pltpu


def _node_features_kernel(x_ref, e_ref, idx_ref, wuv_ref, buv_ref, we_ref,
                          be_ref, out_ref, *, nodes, k, hidden, bf16_exp,
                          approx_recip):
    n, h = nodes, hidden                        # h = padded hidden (multiple of 128)

    # ---- Fused Ux / Vx projection: one (N, H) @ (H, 2H) MXU matmul. ---------
    x = x_ref[0].astype(jnp.bfloat16)                               # (N, H)
    uv = jnp.dot(x, wuv_ref[...], preferred_element_type=jnp.float32)
    uv = uv + buv_ref[...]                                          # (N, 2H) f32
    ux = uv[:, :h]                                                  # lane-tile-aligned slice
    vx = uv[:, h:].astype(jnp.bfloat16)                             # (N, H) bf16 MXU operand

    # ---- Fused gather: ONE transposed-one-hot x Vx MXU matmul. --------------
    # idx_ref[0] is a lane-dense (1, K*N) int32 row in K-major order
    # (column r = kk*N + nn  ->  edge_index[b, nn*K + kk]).
    node_id = jax.lax.broadcasted_iota(jnp.int32, (n, k * n), 0)
    oh_t = (node_id == idx_ref[0]).astype(jnp.bfloat16)             # (N, K*N)
    vx_g = jax.lax.dot_general(                                     # (K*N, H) f32, K-major rows
        oh_t, vx, (((0,), (0,)), ((), ())),
        preferred_element_type=jnp.float32)

    we = we_ref[...]                                                # (H, H) bf16
    be = be_ref[...]                                                # (1, H) f32

    # ---- Online softmax over the K neighbour slots (only m/s/acc live). -----
    m = s = acc = None
    for kk in range(k):
        # k-th slab of e in native layout: static, 128-aligned column slice of
        # the VMEM-resident (N, K*H) block; bf16 cast fused here (no HBM pass).
        e_slab = e_ref[0, :, kk * h:(kk + 1) * h].astype(jnp.bfloat16)
        ve = jnp.dot(e_slab, we, preferred_element_type=jnp.float32) + be   # (N, H) f32
        vg = vx_g[kk * n:(kk + 1) * n, :]                                   # (N, H) f32
        if kk == 0:
            m = ve                          # exp(ve - m) == 1 exactly
            s = jnp.ones_like(ve)
            acc = vg
        else:
            m_new = jnp.maximum(m, ve)
            alpha = jnp.exp(m - m_new)
            d = ve - m_new
            if bf16_exp:                    # v6e/v7x: bf16 EUP exp (do not use on v5e)
                p = jnp.exp(d.astype(jnp.bfloat16)).astype(jnp.float32)
            else:
                p = jnp.exp(d)
            s = alpha * s + p
            acc = alpha * acc + p * vg
            m = m_new

    # Deferred softmax normalization: one reciprocal instead of K divides.
    if approx_recip:
        inv = pl.reciprocal(s, approx=True)   # ~2^-12 rel. error (flagged per review)
    else:
        inv = 1.0 / s
    out_ref[0] = (ux + acc * inv).astype(out_ref.dtype)


def node_features(x, e, edge_index, params, sparse_factor, *,
                  bf16_exp=False, approx_recip=True):
    """NodeFeatures forward (is_pdp=False).  edge_index values must be in [0, N)."""
    B, N, H = x.shape
    K = sparse_factor
    assert e.shape == (B, N * K, H)
    assert edge_index.shape == (B, N * K)

    wu, bu, wv, bv, we, be = params

    # Pad hidden dim to a lane-tile multiple (no-op for production H=128) so
    # every block / store is lane-dense.  Zero padding is exact end-to-end.
    Hp = ((H + 127) // 128) * 128
    ph = Hp - H
    if ph:
        x = jnp.pad(x, ((0, 0), (0, 0), (0, ph)))
        e = jnp.pad(e, ((0, 0), (0, 0), (0, ph)))
        wu = jnp.pad(wu, ((0, ph), (0, ph)))
        wv = jnp.pad(wv, ((0, ph), (0, ph)))
        we = jnp.pad(we, ((0, ph), (0, ph)))
        bu = jnp.pad(bu, (0, ph))
        bv = jnp.pad(bv, (0, ph))
        be = jnp.pad(be, (0, ph))

    # Fused node/to projection weights: bf16 MXU operands, f32 biases.
    w_uv = jnp.concatenate([wu, wv], axis=1).astype(jnp.bfloat16)        # (Hp, 2Hp)
    b_uv = jnp.concatenate([bu, bv]).reshape(1, 2 * Hp).astype(jnp.float32)
    w_e = we.astype(jnp.bfloat16)                                        # (Hp, Hp)
    b_e = be.reshape(1, Hp).astype(jnp.float32)

    # e stays in NATIVE layout: (B, N*K, Hp) -> (B, N, K*Hp) is a free reshape
    # (each node's K slabs are already contiguous).  No transpose, no cast pass.
    e_nat = e.reshape(B, N, K * Hp)

    # edge_index is tiny: reorder K-major and keep it LANE-dense (1, K*N).
    idx_km = jnp.transpose(edge_index.reshape(B, N, K), (0, 2, 1))
    idx_km = idx_km.reshape(B, 1, K * N).astype(jnp.int32)

    kernel = partial(_node_features_kernel, nodes=N, k=K, hidden=Hp,
                     bf16_exp=bf16_exp, approx_recip=approx_recip)

    out = pl.pallas_call(
        kernel,
        out_shape=jax.ShapeDtypeStruct((B, N, Hp), x.dtype),
        grid_spec=pltpu.PrefetchScalarGridSpec(
            num_scalar_prefetch=0,
            grid=(B,),
            in_specs=[
                pl.BlockSpec((1, N, Hp), lambda b: (b, 0, 0)),        # x (f32)
                pl.BlockSpec((1, N, K * Hp), lambda b: (b, 0, 0)),    # e, native layout (f32)
                pl.BlockSpec((1, 1, K * N), lambda b: (b, 0, 0)),     # edge_index (int32, lane-dense)
                pl.BlockSpec((Hp, 2 * Hp), lambda b: (0, 0)),         # W_u | W_v (bf16)
                pl.BlockSpec((1, 2 * Hp), lambda b: (0, 0)),          # b_u | b_v (f32)
                pl.BlockSpec((Hp, Hp), lambda b: (0, 0)),             # W_e (bf16)
                pl.BlockSpec((1, Hp), lambda b: (0, 0)),              # b_e (f32)
            ],
            out_specs=pl.BlockSpec((1, N, Hp), lambda b: (b, 0, 0)),
        ),
        compiler_params=pltpu.CompilerParams(
            dimension_semantics=("parallel",)),
    )(x, e_nat, idx_km, w_uv, b_uv, w_e, b_e)

    return out[:, :, :H] if ph else out


def node_features_reference(x, e, edge_index, params, sparse_factor):
    """Pure-JAX reference mirroring the PyTorch forward (all f32)."""
    wu, bu, wv, bv, we, be = params
    B, N, H = x.shape
    K = sparse_factor
    ux = x @ wu + bu
    vx = x @ wv + bv
    ve = e @ we + be
    ve = jax.nn.softmax(ve.reshape(B, N, K, H), axis=2).reshape(B, N * K, H)
    vx_g = jnp.take_along_axis(vx, edge_index[:, :, None], axis=1)    # (B, NK, H)
    to = (ve * vx_g).reshape(B, N, K, H).sum(axis=2)
    return ux + to


if __name__ == "__main__":
    B, N, H, K = 2, 8, 32, 4   # batch, nodes, hidden_dim, sparse_factor

    key = jax.random.PRNGKey(0)
    keys = jax.random.split(key, 9)
    bound = 1.0 / (H ** 0.5)

    # Deterministic, nn.Linear-style uniform init (weights stored as (in, out)).
    wu = jax.random.uniform(keys[0], (H, H), jnp.float32, -bound, bound)
    bu = jax.random.uniform(keys[1], (H,), jnp.float32, -bound, bound)
    wv = jax.random.uniform(keys[2], (H, H), jnp.float32, -bound, bound)
    bv = jax.random.uniform(keys[3], (H,), jnp.float32, -bound, bound)
    we = jax.random.uniform(keys[4], (H, H), jnp.float32, -bound, bound)
    be = jax.random.uniform(keys[5], (H,), jnp.float32, -bound, bound)
    params = (wu, bu, wv, bv, we, be)

    x = jax.random.normal(keys[6], (B, N, H), jnp.float32)
    e = jax.random.normal(keys[7], (B, N * K, H), jnp.float32)
    edge_index = jax.random.randint(keys[8], (B, N * K), 0, N, dtype=jnp.int32)

    out = node_features(x, e, edge_index, params, K)
    out = jax.block_until_ready(out)

    ref = node_features_reference(x, e, edge_index, params, K)
    assert out.shape == (B, N, H)
    assert jnp.allclose(out, ref, atol=1e-2, rtol=1e-2), (
        f"max abs diff {jnp.max(jnp.abs(out - ref))}")

    print("KERNEL_OK")
</pallas_src>

<mosaic_0001>
module attributes {stable_mosaic.version = 11 : i64} {
  func.func @_node_features_kernel(%arg0: i32, %arg1: memref<1x8x128xf32, #tpu.memory_space<vmem>>, %arg2: memref<1x8x512xf32, #tpu.memory_space<vmem>>, %arg3: memref<1x1x32xi32, #tpu.memory_space<vmem>>, %arg4: memref<128x256xbf16, #tpu.memory_space<vmem>>, %arg5: memref<1x256xf32, #tpu.memory_space<vmem>>, %arg6: memref<128x128xbf16, #tpu.memory_space<vmem>>, %arg7: memref<1x128xf32, #tpu.memory_space<vmem>>, %arg8: memref<1x8x128xf32, #tpu.memory_space<vmem>>) attributes {dimension_semantics = [#tpu.dimension_semantics<parallel>], iteration_bounds = array<i64: 2>, scalar_prefetch = 0 : i64, scratch_operands = 0 : i64, tpu.core_type = #tpu.core_type<tc>, window_params = [{transform_indices = @transform_0, window_bounds = array<i64: 1, 8, 128>}, {transform_indices = @transform_1, window_bounds = array<i64: 1, 8, 512>}, {transform_indices = @transform_2, window_bounds = array<i64: 1, 1, 32>}, {pipeline_mode = #tpu.pipeline_mode<synchronous>, transform_indices = @transform_3, window_bounds = array<i64: 128, 256>}, {pipeline_mode = #tpu.pipeline_mode<synchronous>, transform_indices = @transform_4, window_bounds = array<i64: 1, 256>}, {pipeline_mode = #tpu.pipeline_mode<synchronous>, transform_indices = @transform_5, window_bounds = array<i64: 128, 128>}, {pipeline_mode = #tpu.pipeline_mode<synchronous>, transform_indices = @transform_6, window_bounds = array<i64: 1, 128>}, {transform_indices = @transform_7, window_bounds = array<i64: 1, 8, 128>}]} {
    %c0 = arith.constant 0 : index
    %c0_0 = arith.constant 0 : index
    %c0_1 = arith.constant 0 : index
    %0 = vector.load %arg1[%c0, %c0_0, %c0_1] : memref<1x8x128xf32, #tpu.memory_space<vmem>>, vector<1x8x128xf32>
    %1 = vector.shape_cast %0 : vector<1x8x128xf32> to vector<8x128xf32>
    %2 = arith.truncf %1 : vector<8x128xf32> to vector<8x128xbf16>
    %c0_2 = arith.constant 0 : index
    %c0_3 = arith.constant 0 : index
    %3 = vector.load %arg4[%c0_2, %c0_3] : memref<128x256xbf16, #tpu.memory_space<vmem>>, vector<128x256xbf16>
    %cst = arith.constant dense<0.000000e+00> : vector<8x256xf32>
    %4 = tpu.matmul %2, %3, %cst {dimension_numbers = #tpu.dot_dimension_numbers<[1], [0], [0], [1], [0, 0, 1, 1], [], []>} : vector<8x128xbf16>, vector<128x256xbf16>, vector<8x256xf32> -> vector<8x256xf32>
    %c0_4 = arith.constant 0 : index
    %c0_5 = arith.constant 0 : index
    %5 = vector.load %arg5[%c0_4, %c0_5] : memref<1x256xf32, #tpu.memory_space<vmem>>, vector<1x256xf32>
    %6 = vector.broadcast %5 : vector<1x256xf32> to vector<8x256xf32>
    %7 = arith.addf %4, %6 : vector<8x256xf32>
    %8 = vector.extract_strided_slice %7 {offsets = [0, 0], sizes = [8, 128], strides = [1, 1]} : vector<8x256xf32> to vector<8x128xf32>
    %9 = vector.extract_strided_slice %7 {offsets = [0, 128], sizes = [8, 128], strides = [1, 1]} : vector<8x256xf32> to vector<8x128xf32>
    %10 = arith.truncf %9 : vector<8x128xf32> to vector<8x128xbf16>
    %11 = tpu.iota {dimensions = array<i32: 0>} : vector<8x32xi32>
    %c0_6 = arith.constant 0 : index
    %c0_7 = arith.constant 0 : index
    %c0_8 = arith.constant 0 : index
    %12 = vector.load %arg3[%c0_6, %c0_7, %c0_8] : memref<1x1x32xi32, #tpu.memory_space<vmem>>, vector<1x1x32xi32>
    %13 = vector.shape_cast %12 : vector<1x1x32xi32> to vector<1x32xi32>
    %14 = vector.broadcast %13 : vector<1x32xi32> to vector<8x32xi32>
    %15 = arith.cmpi eq, %11, %14 : vector<8x32xi32>
    %16 = arith.extui %15 : vector<8x32xi1> to vector<8x32xi32>
    %17 = arith.sitofp %16 : vector<8x32xi32> to vector<8x32xf32>
    %18 = arith.truncf %17 : vector<8x32xf32> to vector<8x32xbf16>
    %cst_9 = arith.constant dense<0.000000e+00> : vector<32x128xf32>
    %19 = tpu.matmul %18, %10, %cst_9 {dimension_numbers = #tpu.dot_dimension_numbers<[0], [0], [1], [1], [0, 1, 1, 1], [], []>} : vector<8x32xbf16>, vector<8x128xbf16>, vector<32x128xf32> -> vector<32x128xf32>
    %c0_10 = arith.constant 0 : index
    %c0_11 = arith.constant 0 : index
    %20 = vector.load %arg6[%c0_10, %c0_11] : memref<128x128xbf16, #tpu.memory_space<vmem>>, vector<128x128xbf16>
    %c0_12 = arith.constant 0 : index
    %c0_13 = arith.constant 0 : index
    %21 = vector.load %arg7[%c0_12, %c0_13] : memref<1x128xf32, #tpu.memory_space<vmem>>, vector<1x128xf32>
    %c0_14 = arith.constant 0 : index
    %c0_15 = arith.constant 0 : index
    %c0_16 = arith.constant 0 : index
    %22 = vector.load %arg2[%c0_14, %c0_15, %c0_16] : memref<1x8x512xf32, #tpu.memory_space<vmem>>, vector<1x8x128xf32>
    %23 = vector.shape_cast %22 : vector<1x8x128xf32> to vector<8x128xf32>
    %24 = arith.truncf %23 : vector<8x128xf32> to vector<8x128xbf16>
    %cst_17 = arith.constant dense<0.000000e+00> : vector<8x128xf32>
    %25 = tpu.matmul %24, %20, %cst_17 {dimension_numbers = #tpu.dot_dimension_numbers<[1], [0], [0], [1], [0, 0, 1, 1], [], []>} : vector<8x128xbf16>, vector<128x128xbf16>, vector<8x128xf32> -> vector<8x128xf32>
    %26 = vector.broadcast %21 : vector<1x128xf32> to vector<8x128xf32>
    %27 = arith.addf %25, %26 : vector<8x128xf32>
    %28 = vector.extract_strided_slice %19 {offsets = [0, 0], sizes = [8, 128], strides = [1, 1]} : vector<32x128xf32> to vector<8x128xf32>
    %cst_18 = arith.constant 1.000000e+00 : f32
    %29 = vector.broadcast %cst_18 : f32 to vector<8x128xf32>
    %c0_19 = arith.constant 0 : index
    %c0_20 = arith.constant 0 : index
    %c128 = arith.constant 128 : index
    %30 = vector.load %arg2[%c0_19, %c0_20, %c128] : memref<1x8x512xf32, #tpu.memory_space<vmem>>, vector<1x8x128xf32>
    %31 = vector.shape_cast %30 : vector<1x8x128xf32> to vector<8x128xf32>
    %32 = arith.truncf %31 : vector<8x128xf32> to vector<8x128xbf16>
    %cst_21 = arith.constant dense<0.000000e+00> : vector<8x128xf32>
    %33 = tpu.matmul %32, %20, %cst_21 {dimension_numbers = #tpu.dot_dimension_numbers<[1], [0], [0], [1], [0, 0, 1, 1], [], []>} : vector<8x128xbf16>, vector<128x128xbf16>, vector<8x128xf32> -> vector<8x128xf32>
    %34 = vector.broadcast %21 : vector<1x128xf32> to vector<8x128xf32>
    %35 = arith.addf %33, %34 : vector<8x128xf32>
    %36 = vector.extract_strided_slice %19 {offsets = [8, 0], sizes = [8, 128], strides = [1, 1]} : vector<32x128xf32> to vector<8x128xf32>
    %37 = arith.maximumf %27, %35 : vector<8x128xf32>
    %38 = arith.subf %27, %37 : vector<8x128xf32>
    %39 = math.exp %38 : vector<8x128xf32>
    %40 = arith.subf %35, %37 : vector<8x128xf32>
    %41 = math.exp %40 : vector<8x128xf32>
    %42 = arith.mulf %39, %29 : vector<8x128xf32>
    %43 = arith.addf %42, %41 : vector<8x128xf32>
    %44 = arith.mulf %39, %28 : vector<8x128xf32>
    %45 = arith.mulf %41, %36 : vector<8x128xf32>
    %46 = arith.addf %44, %45 : vector<8x128xf32>
    %c0_22 = arith.constant 0 : index
    %c0_23 = arith.constant 0 : index
    %c256 = arith.constant 256 : index
    %47 = vector.load %arg2[%c0_22, %c0_23, %c256] : memref<1x8x512xf32, #tpu.memory_space<vmem>>, vector<1x8x128xf32>
    %48 = vector.shape_cast %47 : vector<1x8x128xf32> to vector<8x128xf32>
    %49 = arith.truncf %48 : vector<8x128xf32> to vector<8x128xbf16>
    %cst_24 = arith.constant dense<0.000000e+00> : vector<8x128xf32>
    %50 = tpu.matmul %49, %20, %cst_24 {dimension_numbers = #tpu.dot_dimension_numbers<[1], [0], [0], [1], [0, 0, 1, 1], [], []>} : vector<8x128xbf16>, vector<128x128xbf16>, vector<8x128xf32> -> vector<8x128xf32>
    %51 = vector.broadcast %21 : vector<1x128xf32> to vector<8x128xf32>
    %52 = arith.addf %50, %51 : vector<8x128xf32>
    %53 = vector.extract_strided_slice %19 {offsets = [16, 0], sizes = [8, 128], strides = [1, 1]} : vector<32x128xf32> to vector<8x128xf32>
    %54 = arith.maximumf %37, %52 : vector<8x128xf32>
    %55 = arith.subf %37, %54 : vector<8x128xf32>
    %56 = math.exp %55 : vector<8x128xf32>
    %57 = arith.subf %52, %54 : vector<8x128xf32>
    %58 = math.exp %57 : vector<8x128xf32>
    %59 = arith.mulf %56, %43 : vector<8x128xf32>
    %60 = arith.addf %59, %58 : vector<8x128xf32>
    %61 = arith.mulf %56, %46 : vector<8x128xf32>
    %62 = arith.mulf %58, %53 : vector<8x128xf32>
    %63 = arith.addf %61, %62 : vector<8x128xf32>
    %c0_25 = arith.constant 0 : index
    %c0_26 = arith.constant 0 : index
    %c384 = arith.constant 384 : index
    %64 = vector.load %arg2[%c0_25, %c0_26, %c384] : memref<1x8x512xf32, #tpu.memory_space<vmem>>, vector<1x8x128xf32>
    %65 = vector.shape_cast %64 : vector<1x8x128xf32> to vector<8x128xf32>
    %66 = arith.truncf %65 : vector<8x128xf32> to vector<8x128xbf16>
    %cst_27 = arith.constant dense<0.000000e+00> : vector<8x128xf32>
    %67 = tpu.matmul %66, %20, %cst_27 {dimension_numbers = #tpu.dot_dimension_numbers<[1], [0], [0], [1], [0, 0, 1, 1], [], []>} : vector<8x128xbf16>, vector<128x128xbf16>, vector<8x128xf32> -> vector<8x128xf32>
    %68 = vector.broadcast %21 : vector<1x128xf32> to vector<8x128xf32>
    %69 = arith.addf %67, %68 : vector<8x128xf32>
    %70 = vector.extract_strided_slice %19 {offsets = [24, 0], sizes = [8, 128], strides = [1, 1]} : vector<32x128xf32> to vector<8x128xf32>
    %71 = arith.maximumf %54, %69 : vector<8x128xf32>
    %72 = arith.subf %54, %71 : vector<8x128xf32>
    %73 = math.exp %72 : vector<8x128xf32>
    %74 = arith.subf %69, %71 : vector<8x128xf32>
    %75 = math.exp %74 : vector<8x128xf32>
    %76 = arith.mulf %73, %60 : vector<8x128xf32>
    %77 = arith.addf %76, %75 : vector<8x128xf32>
    %78 = arith.mulf %73, %63 : vector<8x128xf32>
    %79 = arith.mulf %75, %70 : vector<8x128xf32>
    %80 = arith.addf %78, %79 : vector<8x128xf32>
    %81 = tpu.reciprocal %77 {approx = true} : vector<8x128xf32> -> vector<8x128xf32>
    %82 = arith.mulf %80, %81 : vector<8x128xf32>
    %83 = arith.addf %8, %82 : vector<8x128xf32>
    %c0_28 = arith.constant 0 : index
    %c0_29 = arith.constant 0 : index
    %c0_30 = arith.constant 0 : index
    %84 = vector.load %arg8[%c0_28, %c0_29, %c0_30] : memref<1x8x128xf32, #tpu.memory_space<vmem>>, vector<1x8x128xf32>
    %85 = vector.shape_cast %84 : vector<1x8x128xf32> to vector<8x128xf32>
    %86 = vector.shape_cast %83 : vector<8x128xf32> to vector<1x8x128xf32>
    tpu.vector_store %arg8[%c0_28, %c0_29, %c0_30], %86 {strides = array<i32>} : memref<1x8x128xf32, #tpu.memory_space<vmem>>, vector<1x8x128xf32>,
    return
  }
  func.func @transform_0(%arg0: i32) -> (i32, i32, i32) {
    %c0_i32 = arith.constant 0 : i32
    %c0_i32_0 = arith.constant 0 : i32
    %c0_i32_1 = arith.constant 0 : i32
    return %arg0, %c0_i32, %c0_i32_0 : i32, i32, i32
  }
  func.func @transform_1(%arg0: i32) -> (i32, i32, i32) {
    %c0_i32 = arith.constant 0 : i32
    %c0_i32_0 = arith.constant 0 : i32
    %c0_i32_1 = arith.constant 0 : i32
    return %arg0, %c0_i32, %c0_i32_0 : i32, i32, i32
  }
  func.func @transform_2(%arg0: i32) -> (i32, i32, i32) {
    %c0_i32 = arith.constant 0 : i32
    %c0_i32_0 = arith.constant 0 : i32
    %c0_i32_1 = arith.constant 0 : i32
    return %arg0, %c0_i32, %c0_i32_0 : i32, i32, i32
  }
  func.func @transform_3(%arg0: i32) -> (i32, i32) {
    %c0_i32 = arith.constant 0 : i32
    %c0_i32_0 = arith.constant 0 : i32
    %c0_i32_1 = arith.constant 0 : i32
    return %c0_i32, %c0_i32_0 : i32, i32
  }
  func.func @transform_4(%arg0: i32) -> (i32, i32) {
    %c0_i32 = arith.constant 0 : i32
    %c0_i32_0 = arith.constant 0 : i32
    %c0_i32_1 = arith.constant 0 : i32
    return %c0_i32, %c0_i32_0 : i32, i32
  }
  func.func @transform_5(%arg0: i32) -> (i32, i32) {
    %c0_i32 = arith.constant 0 : i32
    %c0_i32_0 = arith.constant 0 : i32
    %c0_i32_1 = arith.constant 0 : i32
    return %c0_i32, %c0_i32_0 : i32, i32
  }
  func.func @transform_6(%arg0: i32) -> (i32, i32) {
    %c0_i32 = arith.constant 0 : i32
    %c0_i32_0 = arith.constant 0 : i32
    %c0_i32_1 = arith.constant 0 : i32
    return %c0_i32, %c0_i32_0 : i32, i32
  }
  func.func @transform_7(%arg0: i32) -> (i32, i32, i32) {
    %c0_i32 = arith.constant 0 : i32
    %c0_i32_0 = arith.constant 0 : i32
    %c0_i32_1 = arith.constant 0 : i32
    return %arg0, %c0_i32, %c0_i32_0 : i32, i32, i32
  }
}

</mosaic_0001>

<llo_original>
// kernel: tpu_custom_call.1
$region0: #{tpu_custom_call.1}
  #allocation0 [shape = 'u32[]', space=smem, size = 0x4, offset = 0x4, fixed_abs, tag = 'smem constant byte address 0x4 - core index']
  #allocation1 [shape = 'u32[144,128]{1,0:T(1,128)}', space=vmem, size = 0x12000, scoped, tag = 'internal scratch']
  %s0 = inlined_call_operand.hbm [shape: f32[2,8,128], index: 0, kind: input, shape index: {}]
  %s1 = inlined_call_operand.hbm [shape: f32[2,8,512], index: 1, kind: input, shape index: {}]
  %s2 = inlined_call_operand.vmem [shape: s32[2,1,32], index: 2, kind: input, shape index: {}]
  %s3 = inlined_call_operand.hbm [shape: bf16[128,256], index: 3, kind: input, shape index: {}]
  %s4 = inlined_call_operand.vmem [shape: f32[1,256], index: 4, kind: input, shape index: {}]
  %s5 = inlined_call_operand.hbm [shape: bf16[128,128], index: 5, kind: input, shape index: {}]
  %s6 = inlined_call_operand.vmem [shape: f32[1,128], index: 6, kind: input, shape index: {}]
  %s7 = inlined_call_operand.hbm [shape: f32[2,8,128], index: 7, kind: output, shape index: {}]
  %s8 = sld [smem:[#allocation0]]
  $region77: #{tpu_custom_call.1} parent=0
    _
  %s10 = ssub.s32 1, %s8
  %s11 = scalar_select 0, %s10, %s8
  $region1: #{tpu_custom_call.1} parent=0
    #allocation2 [shape = 'u8[8192]{0}', space=vmem, size = 0x2000, scoped, tag = 'input window, operand 0']
    #allocation3 [shape = 's32[2]{0}', space=sflag, size = 0x8, scoped, tag = 'scoped memory for tpu_custom_call.1']
    #allocation4 [shape = 's32[2]{0}', space=sflag, size = 0x8, scoped, tag = 'scoped memory for tpu_custom_call.1']
    #allocation5 [shape = 'u8[32768]{0}', space=vmem, size = 0x8000, scoped, tag = 'input window, operand 1']
    #allocation6 [shape = 's32[2]{0}', space=sflag, size = 0x8, scoped, tag = 'scoped memory for tpu_custom_call.1']
    #allocation7 [shape = 'u8[65536]{0}', space=vmem, size = 0x10000, scoped, tag = 'input window, operand 3, single buffered']
    #allocation8 [shape = 'u8[32768]{0}', space=vmem, size = 0x8000, scoped, tag = 'input window, operand 5, single buffered']
    #allocation9 [shape = 's32[1]{0}', space=sflag, size = 0x4, scoped, tag = 'scoped memory for tpu_custom_call.1']
    #allocation10 [shape = 'u8[8192]{0}', space=vmem, size = 0x2000, scoped, tag = 'output window, operand 0']
    %12 = vsyncpa [#allocation3], 0
    %s13 = scalar_lea.sflag [#allocation3], 1
    %14 = vsyncpa %s13, 0
    %15 = vsyncpa [#allocation6], 0
    %s16 = scalar_lea.sflag [#allocation6], 1
    %17 = vsyncpa %s16, 0
    %18 = vsyncpa [#allocation9], 0
    %19 = vsyncpa [#allocation4], 0
    %s20 = scalar_lea.sflag [#allocation4], 1
    %21 = vsyncpa %s20, 0
    loop: start=0, step=1, limit=4
    $region2: #{tpu_custom_call.1} parent=1 // loop_pre_header
      _
    $region3: #{tpu_custom_call.1} parent=1 // loop_header
      %s23 = sphi 0, %s27
      %p24 = scmp.ge.s32.totalorder %s23, 4
      %s33 = sphi 0, %s35
      %s36 = sphi 0, %s33
      %s37 = sphi 0, %s36
      %s53 = sphi 0, %s37
      %s59 = sphi 0, %s61
      %s62 = sphi 0, %s59
      %s63 = sphi 0, %s62
      %s79 = sphi 0, %s63
      %s85 = sphi 0, %s87
      %s88 = sphi 0, %s85
      %s89 = sphi 0, %s88
      %s105 = sphi 0, %s89
      %s109 = sphi 0, %s109
      %s111 = sphi 0, %s109
      %s112 = sphi 0, %s111
      %s126 = sphi 0, %s112
      %s130 = sphi 0, %s130
      %s132 = sphi 0, %s130
      %s133 = sphi 0, %s132
      %s147 = sphi 0, %s133
      %s151 = sphi 0, %s151
      %s153 = sphi 0, %s151
      %s154 = sphi 0, %s153
      %s168 = sphi 0, %s154
      %s172 = sphi 0, %s172
      %s174 = sphi 0, %s172
      %s175 = sphi 0, %s174
      %s189 = sphi 0, %s175
      %s195 = sphi 0, %s197
      %s198 = sphi 0, %s195
      %s199 = sphi 0, %s198
      %s215 = sphi 0, %s199
    $region4: #{tpu_custom_call.1} parent=1 // loop_header_branch
      %26 = sbr.rel (%p24) target = $region8
    $region5: #{tpu_custom_call.1} parent=1 // loop_body
      %s28 = ssub.s32 %s23, 1
      %s29 = ssub.s32 %s23, 2
      %s30 = sadd.s32 %s23, 1
      %s31 = ssub.s32 %s23, %s30
      %p32 = scmp.eq.s32.totalorder %s31, 0
      %s34 = sadd.s32 %s33, 1
      %s35 = scalar_select %p32, %s33, %s34
      %p38 = pneg %p32
      %p39 = scmp.eq.s32.totalorder %s23, 1
      %p40 = por %p38, %p39
      %p41 = scmp.ne.s32.totalorder %s33, %s36
      %p42 = scmp.eq.s32.totalorder %s23, 0
      %p43 = por %p41, %p42
      %p44 = scmp.ne.s32.totalorder %s33, %s36
      %p45 = scmp.eq.s32.totalorder %s28, 1
      %p46 = por %p44, %p45
      %p47 = scmp.ne.s32.totalorder %s36, %s37
      %p48 = scmp.eq.s32.totalorder %s28, 0
      %p49 = por %p47, %p48
      %p50 = scmp.ne.s32.totalorder %s36, %s37
      %p51 = scmp.eq.s32.totalorder %s29, 1
      %p52 = por %p50, %p51
      %p54 = scmp.ne.s32.totalorder %s37, %s53
      %p55 = scmp.eq.s32.totalorder %s29, 0
      %p56 = por %p54, %p55
      %s57 = ssub.s32 %s23, %s30
      %p58 = scmp.eq.s32.totalorder %s57, 0
      %s60 = sadd.s32 %s59, 1
      %s61 = scalar_select %p58, %s59, %s60
      %p64 = pneg %p58
      %p65 = scmp.eq.s32.totalorder %s23, 1
      %p66 = por %p64, %p65
      %p67 = scmp.ne.s32.totalorder %s59, %s62
      %p68 = scmp.eq.s32.totalorder %s23, 0
      %p69 = por %p67, %p68
      %p70 = scmp.ne.s32.totalorder %s59, %s62
      %p71 = scmp.eq.s32.totalorder %s28, 1
      %p72 = por %p70, %p71
      %p73 = scmp.ne.s32.totalorder %s62, %s63
      %p74 = scmp.eq.s32.totalorder %s28, 0
      %p75 = por %p73, %p74
      %p76 = scmp.ne.s32.totalorder %s62, %s63
      %p77 = scmp.eq.s32.totalorder %s29, 1
      %p78 = por %p76, %p77
      %p80 = scmp.ne.s32.totalorder %s63, %s79
      %p81 = scmp.eq.s32.totalorder %s29, 0
      %p82 = por %p80, %p81
      %s83 = ssub.s32 %s23, %s30
      %p84 = scmp.eq.s32.totalorder %s83, 0
      %s86 = sadd.s32 %s85, 1
      %s87 = scalar_select %p84, %s85, %s86
      %p90 = pneg %p84
      %p91 = scmp.eq.s32.totalorder %s23, 1
      %p92 = por %p90, %p91
      %p93 = scmp.ne.s32.totalorder %s85, %s88
      %p94 = scmp.eq.s32.totalorder %s23, 0
      %p95 = por %p93, %p94
      %p96 = scmp.ne.s32.totalorder %s85, %s88
      %p97 = scmp.eq.s32.totalorder %s28, 1
      %p98 = por %p96, %p97
      %p99 = scmp.ne.s32.totalorder %s88, %s89
      %p100 = scmp.eq.s32.totalorder %s28, 0
      %p101 = por %p99, %p100
      %p102 = scmp.ne.s32.totalorder %s88, %s89
      %p103 = scmp.eq.s32.totalorder %s29, 1
      %p104 = por %p102, %p103
      %p106 = scmp.ne.s32.totalorder %s89, %s105
      %p107 = scmp.eq.s32.totalorder %s29, 0
      %p108 = por %p106, %p107
      %s110 = sadd.s32 %s109, 1
      %p113 = scmp.eq.s32.totalorder %s23, 1
      %p114 = scmp.ne.s32.totalorder %s109, %s111
      %p115 = scmp.eq.s32.totalorder %s23, 0
      %p116 = por %p114, %p115
      %p117 = scmp.ne.s32.totalorder %s109, %s111
      %p118 = scmp.eq.s32.totalorder %s28, 1
      %p119 = por %p117, %p118
      %p120 = scmp.ne.s32.totalorder %s111, %s112
      %p121 = scmp.eq.s32.totalorder %s28, 0
      %p122 = por %p120, %p121
      %p123 = scmp.ne.s32.totalorder %s111, %s112
      %p124 = scmp.eq.s32.totalorder %s29, 1
      %p125 = por %p123, %p124
      %p127 = scmp.ne.s32.totalorder %s112, %s126
      %p128 = scmp.eq.s32.totalorder %s29, 0
      %p129 = por %p127, %p128
      %s131 = sadd.s32 %s130, 1
      %p134 = scmp.eq.s32.totalorder %s23, 1
      %p135 = scmp.ne.s32.totalorder %s130, %s132
      %p136 = scmp.eq.s32.totalorder %s23, 0
      %p137 = por %p135, %p136
      %p138 = scmp.ne.s32.totalorder %s130, %s132
      %p139 = scmp.eq.s32.totalorder %s28, 1
      %p140 = por %p138, %p139
      %p141 = scmp.ne.s32.totalorder %s132, %s133
      %p142 = scmp.eq.s32.totalorder %s28, 0
      %p143 = por %p141, %p142
      %p144 = scmp.ne.s32.totalorder %s132, %s133
      %p145 = scmp.eq.s32.totalorder %s29, 1
      %p146 = por %p144, %p145
      %p148 = scmp.ne.s32.totalorder %s133, %s147
      %p149 = scmp.eq.s32.totalorder %s29, 0
      %p150 = por %p148, %p149
      %s152 = sadd.s32 %s151, 1
      %p155 = scmp.eq.s32.totalorder %s23, 1
      %p156 = scmp.ne.s32.totalorder %s151, %s153
      %p157 = scmp.eq.s32.totalorder %s23, 0
      %p158 = por %p156, %p157
      %p159 = scmp.ne.s32.totalorder %s151, %s153
      %p160 = scmp.eq.s32.totalorder %s28, 1
      %p161 = por %p159, %p160
      %p162 = scmp.ne.s32.totalorder %s153, %s154
      %p163 = scmp.eq.s32.totalorder %s28, 0
      %p164 = por %p162, %p163
      %p165 = scmp.ne.s32.totalorder %s153, %s154
      %p166 = scmp.eq.s32.totalorder %s29, 1
      %p167 = por %p165, %p166
      %p169 = scmp.ne.s32.totalorder %s154, %s168
      %p170 = scmp.eq.s32.totalorder %s29, 0
      %p171 = por %p169, %p170
      %s173 = sadd.s32 %s172, 1
      %p176 = scmp.eq.s32.totalorder %s23, 1
      %p177 = scmp.ne.s32.totalorder %s172, %s174
      %p178 = scmp.eq.s32.totalorder %s23, 0
      %p179 = por %p177, %p178
      %p180 = scmp.ne.s32.totalorder %s172, %s174
      %p181 = scmp.eq.s32.totalorder %s28, 1
      %p182 = por %p180, %p181
      %p183 = scmp.ne.s32.totalorder %s174, %s175
      %p184 = scmp.eq.s32.totalorder %s28, 0
      %p185 = por %p183, %p184
      %p186 = scmp.ne.s32.totalorder %s174, %s175
      %p187 = scmp.eq.s32.totalorder %s29, 1
      %p188 = por %p186, %p187
      %p190 = scmp.ne.s32.totalorder %s175, %s189
      %p191 = scmp.eq.s32.totalorder %s29, 0
      %p192 = por %p190, %p191
      %s193 = ssub.s32 %s23, %s30
      %p194 = scmp.eq.s32.totalorder %s193, 0
      %s196 = sadd.s32 %s195, 1
      %s197 = scalar_select %p194, %s195, %s196
      %p200 = pneg %p194
      %p201 = scmp.eq.s32.totalorder %s23, 1
      %p202 = por %p200, %p201
      %p203 = scmp.ne.s32.totalorder %s195, %s198
      %p204 = scmp.eq.s32.totalorder %s23, 0
      %p205 = por %p203, %p204
      %p206 = scmp.ne.s32.totalorder %s195, %s198
      %p207 = scmp.eq.s32.totalorder %s28, 1
      %p208 = por %p206, %p207
      %p209 = scmp.ne.s32.totalorder %s198, %s199
      %p210 = scmp.eq.s32.totalorder %s28, 0
      %p211 = por %p209, %p210
      %p212 = scmp.ne.s32.totalorder %s198, %s199
      %p213 = scmp.eq.s32.totalorder %s29, 1
      %p214 = por %p212, %p213
      %p216 = scmp.ne.s32.totalorder %s199, %s215
      %p217 = scmp.eq.s32.totalorder %s29, 0
      %p218 = por %p216, %p217
      %p219 = scmp.le.s32.totalorder 1, %s23
      %p220 = scmp.lt.s32.totalorder %s23, 3
      %p221 = pnand %p219, %p220
      %p222 = pneg %p221
      // Predicated region
      $region9: #{tpu_custom_call.1} parent=5 // pred_check
        _
      $region10: #{tpu_custom_call.1} parent=5 // pred_check_branch
        %224 = sbr.rel (%p221) target = $region12
      $region11: #{tpu_custom_call.1} parent=5 // pred_region
        %s225 = ssub.s32 %s23, 1
        // Predicated region
        $region13: #{tpu_custom_call.1} parent=11 // pred_check
          %p226 = pneg %p122
        $region14: #{tpu_custom_call.1} parent=11 // pred_check_branch
          %228 = sbr.rel (%p226) target = $region16
        $region15: #{tpu_custom_call.1} parent=11 // pred_region
          %s230 = ssub.s32 2048, 2048
          %231 = vsyncadd [#allocation6], %s230
          %s232 = sshll.u32 [#allocation7], 4
          %s233 = int_to_ptr.vmem [resolvable:$true] %s232
          %238 = dma.hbm_to_vmem [thread:$0]  %s3, 2048, %s233, [#allocation6], 128, 128, 8
        $region16: #{tpu_custom_call.1} parent=11 // pred_fallthru
          _
        // Predicated region
        $region17: #{tpu_custom_call.1} parent=11 // pred_check
          %p239 = pneg %p143
        $region18: #{tpu_custom_call.1} parent=11 // pred_check_branch
          %241 = sbr.rel (%p239) target = $region20
        $region19: #{tpu_custom_call.1} parent=11 // pred_region
          _
        $region20: #{tpu_custom_call.1} parent=11 // pred_fallthru
          _
        // Predicated region
        $region21: #{tpu_custom_call.1} parent=11 // pred_check
          %p242 = pneg %p164
        $region22: #{tpu_custom_call.1} parent=11 // pred_check_branch
          %244 = sbr.rel (%p242) target = $region24
        $region23: #{tpu_custom_call.1} parent=11 // pred_region
          %s246 = ssub.s32 1024, 1024
          %247 = vsyncadd [#allocation9], %s246
          %s248 = sshll.u32 [#allocation8], 4
          %s249 = int_to_ptr.vmem [resolvable:$true] %s248
          %254 = dma.hbm_to_vmem [thread:$0]  %s5, 1024, %s249, [#allocation9], 64, 64, 4
        $region24: #{tpu_custom_call.1} parent=11 // pred_fallthru
          _
        // Predicated region
        $region25: #{tpu_custom_call.1} parent=11 // pred_check
          %p255 = pneg %p185
        $region26: #{tpu_custom_call.1} parent=11 // pred_check_branch
          %257 = sbr.rel (%p255) target = $region28
        $region27: #{tpu_custom_call.1} parent=11 // pred_region
          _
        $region28: #{tpu_custom_call.1} parent=11 // pred_fallthru
          _
      $region12: #{tpu_custom_call.1} parent=5 // pred_fallthru
        _
      %p258 = scmp.lt.s32.totalorder %s23, 2
      // Predicated region
      $region29: #{tpu_custom_call.1} parent=5 // pred_check
        %p259 = pneg %p258
      $region30: #{tpu_custom_call.1} parent=5 // pred_check_branch
        %261 = sbr.rel (%p259) target = $region32
      $region31: #{tpu_custom_call.1} parent=5 // pred_region
        // Predicated region
        $region33: #{tpu_custom_call.1} parent=31 // pred_check
          %p262 = pneg %p43
        $region34: #{tpu_custom_call.1} parent=31 // pred_check_branch
          %264 = sbr.rel (%p262) target = $region36
        $region35: #{tpu_custom_call.1} parent=31 // pred_region
          %s265 = sand.u32 %s33, 1
          %s266 = scalar_lea.sflag [#allocation3], %s265
          %s267 = sand.u32 %s33, 1
          %s268 = smul.addr %s267, 8
          %s269 = scalar_lea.vmem [#allocation2], %s268
          %s271 = ssub.s32 128, 128
          %272 = vsyncadd %s266, %s271
          %s273 = smul.addr %s23, 128
          %s274 = scalar_lea.hbm %s0, %s273
          %s276 = sshll.u32 %s269, 4
          %s277 = int_to_ptr.vmem [resolvable:$true] %s276
          %279 = dma.hbm_to_vmem [thread:$0]  %s274, 128, %s277, %s266
        $region36: #{tpu_custom_call.1} parent=31 // pred_fallthru
          _
        // Predicated region
        $region37: #{tpu_custom_call.1} parent=31 // pred_check
          %p280 = pneg %p69
        $region38: #{tpu_custom_call.1} parent=31 // pred_check_branch
          %282 = sbr.rel (%p280) target = $region40
        $region39: #{tpu_custom_call.1} parent=31 // pred_region
          %s283 = sand.u32 %s23, 1
          %s284 = scalar_lea.sflag [#allocation6], %s283
          %s285 = sand.u32 %s59, 1
          %s286 = smul.addr %s285, 32
          %s287 = scalar_lea.vmem [#allocation5], %s286
          %s289 = ssub.s32 512, 512
          %290 = vsyncadd %s284, %s289
          %s291 = smul.addr %s23, 4
          %s292 = smul.addr %s291, 128
          %s293 = scalar_lea.hbm %s1, %s292
          %s295 = sshll.u32 %s287, 4
          %s296 = int_to_ptr.vmem [resolvable:$true] %s295
          %298 = dma.hbm_to_vmem [thread:$0]  %s293, 512, %s296, %s284
        $region40: #{tpu_custom_call.1} parent=31 // pred_fallthru
          _
        // Predicated region
        $region41: #{tpu_custom_call.1} parent=31 // pred_check
          %p299 = pneg %p95
        $region42: #{tpu_custom_call.1} parent=31 // pred_check_branch
          %301 = sbr.rel (%p299) target = $region44
        $region43: #{tpu_custom_call.1} parent=31 // pred_region
          %p302 = scmp.lt.s32.totalorder %s23, 1
          %s303 = scalar_select %p302, %s23, 1
          %s304 = scalar_lea.vmem %s2, %s303
        $region44: #{tpu_custom_call.1} parent=31 // pred_fallthru
          _
      $region32: #{tpu_custom_call.1} parent=5 // pred_fallthru
        _
      %p305 = scmp.le.s32.totalorder 1, %s23
      %p306 = scmp.lt.s32.totalorder %s23, 3
      %p307 = pnand %p305, %p306
      %p308 = pneg %p307
      // Predicated region
      $region45: #{tpu_custom_call.1} parent=5 // pred_check
        _
      $region46: #{tpu_custom_call.1} parent=5 // pred_check_branch
        %310 = sbr.rel (%p307) target = $region48
      $region47: #{tpu_custom_call.1} parent=5 // pred_region
        %s311 = ssub.s32 %s23, 1
        %s312 = sand.u32 %s36, 1
        %s313 = scalar_lea.sflag [#allocation3], %s312
        %s314 = sand.u32 %s36, 1
        %s315 = smul.addr %s314, 8
        %s316 = scalar_lea.vmem [#allocation2], %s315
        // Predicated region
        $region49: #{tpu_custom_call.1} parent=47 // pred_check
          %p317 = pneg %p49
        $region50: #{tpu_custom_call.1} parent=47 // pred_check_branch
          %319 = sbr.rel (%p317) target = $region52
        $region51: #{tpu_custom_call.1} parent=47 // pred_region
          %320 = dma.done %s313, 128
        $region52: #{tpu_custom_call.1} parent=47 // pred_fallthru
          _
        %s321 = sand.u32 %s28, 1
        %s322 = scalar_lea.sflag [#allocation6], %s321
        %s323 = sand.u32 %s62, 1
        %s324 = smul.addr %s323, 32
        %s325 = scalar_lea.vmem [#allocation5], %s324
        // Predicated region
        $region53: #{tpu_custom_call.1} parent=47 // pred_check
          %p326 = pneg %p75
        $region54: #{tpu_custom_call.1} parent=47 // pred_check_branch
          %328 = sbr.rel (%p326) target = $region56
        $region55: #{tpu_custom_call.1} parent=47 // pred_region
          %329 = dma.done %s322, 512
        $region56: #{tpu_custom_call.1} parent=47 // pred_fallthru
          _
        // Predicated region
        $region57: #{tpu_custom_call.1} parent=47 // pred_check
          %p330 = pneg %p122
        $region58: #{tpu_custom_call.1} parent=47 // pred_check_branch
          %332 = sbr.rel (%p330) target = $region60
        $region59: #{tpu_custom_call.1} parent=47 // pred_region
          %333 = dma.done [#allocation6], 2048
        $region60: #{tpu_custom_call.1} parent=47 // pred_fallthru
          _
        // Predicated region
        $region61: #{tpu_custom_call.1} parent=47 // pred_check
          %p334 = pneg %p164
        $region62: #{tpu_custom_call.1} parent=47 // pred_check_branch
          %336 = sbr.rel (%p334) target = $region64
        $region63: #{tpu_custom_call.1} parent=47 // pred_region
          %337 = dma.done [#allocation9], 1024
        $region64: #{tpu_custom_call.1} parent=47 // pred_fallthru
          _
        %s338 = sand.u32 %s36, 1
        %s339 = scalar_lea.sflag [#allocation3], %s338
        %s340 = sand.u32 %s36, 1
        %s341 = smul.addr %s340, 8
        %s342 = scalar_lea.vmem [#allocation2], %s341
        %p343 = pneg %p49
        %p344 = pneg %p46
        %s345 = sand.u32 %s28, 1
        %s346 = scalar_lea.sflag [#allocation6], %s345
        %s347 = sand.u32 %s62, 1
        %s348 = smul.addr %s347, 32
        %s349 = scalar_lea.vmem [#allocation5], %s348
        %p350 = pneg %p75
        %p351 = pneg %p72
        %p352 = scmp.lt.s32.totalorder %s28, 1
        %s353 = scalar_select %p352, %s28, 1
        %s354 = scalar_lea.vmem %s2, %s353
        %p355 = pneg %p101
        %p356 = pneg %p98
        %p357 = pneg %p122
        %p358 = pneg %p119
        %p359 = pneg %p143
        %p360 = pneg %p140
        %p361 = pneg %p164
        %p362 = pneg %p161
        %p363 = pneg %p185
        %p364 = pneg %p182
        %p365 = pneg %p211
        %p366 = pneg %p208
        %s367 = sand.u32 %s198, 1
        %s368 = scalar_lea.sflag [#allocation4], %s367
        %s369 = sand.u32 %s198, 1
        %s370 = smul.addr %s369, 8
        %s371 = scalar_lea.vmem [#allocation10], %s370
        %p372 = scmp.lt.s32.totalorder %s28, 1
        %s373 = scalar_select %p372, %s28, 1
        %s374 = scalar_lea.vmem %s2, %s373
        %v376 = vld [vmem:[%s316] sm:$0xff]
        %v377 = vpack.c.bf16 %v376, %v376
        %v378 = vld [vmem:[#allocation7] sm:$0xff]
        %v379 = vld [vmem:[#allocation7 + $0x8] sm:$0xff]
        %v380 = vld [vmem:[#allocation7 + $0x10] sm:$0xff]
        %v381 = vld [vmem:[#allocation7 + $0x18] sm:$0xff]
        %v382 = vld [vmem:[#allocation7 + $0x20] sm:$0xff]
        %v383 = vld [vmem:[#allocation7 + $0x28] sm:$0xff]
        %v384 = vld [vmem:[#allocation7 + $0x30] sm:$0xff]
        %v385 = vld [vmem:[#allocation7 + $0x38] sm:$0xff]
        %v386 = vld [vmem:[#allocation7 + $0x40] sm:$0xff]
        %v387 = vld [vmem:[#allocation7 + $0x48] sm:$0xff]
        %v388 = vld [vmem:[#allocation7 + $0x50] sm:$0xff]
        %v389 = vld [vmem:[#allocation7 + $0x58] sm:$0xff]
        %v390 = vld [vmem:[#allocation7 + $0x60] sm:$0xff]
        %v391 = vld [vmem:[#allocation7 + $0x68] sm:$0xff]
        %v392 = vld [vmem:[#allocation7 + $0x70] sm:$0xff]
        %v393 = vld [vmem:[#allocation7 + $0x78] sm:$0xff]
        %v394 = vld [vmem:[%s4] sm:$0x3]
        %v396 = vlaneseq
        %v397 = vshrl.u32 %v396, 7
        %v398 = vsub.s32 0, %v397
        %v399 = vrot.slane %v394, %v398
        %v400 = vlaneseq
        %v401 = vshrl.u32 %v400, 7
        %v402 = vsub.s32 1, %v401
        %v403 = vrot.slane %v394, %v402
        %v422 = vunpack.c.l.b16 %v378
        %v423 = vunpack.c.h.b16 %v378
        %v424 = vunpack.c.l.b16 %v379
        %v425 = vunpack.c.h.b16 %v379
        %v426 = vunpack.c.l.b16 %v380
        %v427 = vunpack.c.h.b16 %v380
        %v428 = vunpack.c.l.b16 %v381
        %v429 = vunpack.c.h.b16 %v381
        %v430 = vunpack.c.l.b16 %v382
        %v431 = vunpack.c.h.b16 %v382
        %v432 = vunpack.c.l.b16 %v383
        %v433 = vunpack.c.h.b16 %v383
        %v434 = vunpack.c.l.b16 %v384
        %v435 = vunpack.c.h.b16 %v384
        %v436 = vunpack.c.l.b16 %v385
        %v437 = vunpack.c.h.b16 %v385
        %v438 = vunpack.c.l.b16 %v386
        %v439 = vunpack.c.h.b16 %v386
        %v440 = vunpack.c.l.b16 %v387
        %v441 = vunpack.c.h.b16 %v387
        %v442 = vunpack.c.l.b16 %v388
        %v443 = vunpack.c.h.b16 %v388
        %v444 = vunpack.c.l.b16 %v389
        %v445 = vunpack.c.h.b16 %v389
        %v446 = vunpack.c.l.b16 %v390
        %v447 = vunpack.c.h.b16 %v390
        %v448 = vunpack.c.l.b16 %v391
        %v449 = vunpack.c.h.b16 %v391
        %v450 = vunpack.c.l.b16 %v392
        %v451 = vunpack.c.h.b16 %v392
        %v452 = vunpack.c.l.b16 %v393
        %v453 = vunpack.c.h.b16 %v393
        %v454 = vpack.c.b16 %v424, %v422
        %v455 = vpack.c.b16 %v425, %v423
        %v456 = vpack.c.b16 %v428, %v426
        %v457 = vpack.c.b16 %v429, %v427
        %v458 = vpack.c.b16 %v432, %v430
        %v459 = vpack.c.b16 %v433, %v431
        %v460 = vpack.c.b16 %v436, %v434
        %v461 = vpack.c.b16 %v437, %v435
        %v462 = vpack.c.b16 %v440, %v438
        %v463 = vpack.c.b16 %v441, %v439
        %v464 = vpack.c.b16 %v444, %v442
        %v465 = vpack.c.b16 %v445, %v443
        %v466 = vpack.c.b16 %v448, %v446
        %v467 = vpack.c.b16 %v449, %v447
        %v468 = vpack.c.b16 %v452, %v450
        %v469 = vpack.c.b16 %v453, %v451
        %486 = vmatprep.subr.bf16.mxu0 %v469
        %487 = vmatpush1.bf16.msra.mxu0 %v468
        %488 = vmatprep.subr.bf16.mxu0 %v467
        %489 = vmatpush1.bf16.msra.mxu0 %v466
        %490 = vmatprep.subr.bf16.mxu0 %v465
        %491 = vmatpush1.bf16.msra.mxu0 %v464
        %492 = vmatprep.subr.bf16.mxu0 %v463
        %493 = vmatpush1.bf16.msra.mxu0 %v462
        %494 = vmatprep.subr.bf16.mxu0 %v461
        %495 = vmatpush1.bf16.msra.mxu0 %v460
        %496 = vmatprep.subr.bf16.mxu0 %v459
        %497 = vmatpush1.bf16.msra.mxu0 %v458
        %498 = vmatprep.subr.bf16.mxu0 %v457
        %499 = vmatpush1.bf16.msra.mxu0 %v456
        %500 = vmatprep.subr.bf16.mxu0 %v455
        %501 = vmatpush1.bf16.msra.mxu0 %v454
        %502 = vmatprep.subr.bf16.mxu0 0
        %503 = vmatpush2.bf16.msra.mxu0 0
        %504 = vmatprep.subr.bf16.mxu0 0
        %505 = vmatpush2.bf16.msra.mxu0 0
        %506 = vmatprep.subr.bf16.mxu0 0
        %507 = vmatpush2.bf16.msra.mxu0 0
        %508 = vmatprep.subr.bf16.mxu0 0
        %509 = vmatpush2.bf16.msra.mxu0 0
        %510 = vmatprep.subr.bf16.mxu0 0
        %511 = vmatpush2.bf16.msra.mxu0 0
        %512 = vmatprep.subr.bf16.mxu0 0
        %513 = vmatpush2.bf16.msra.mxu0 0
        %514 = vmatprep.subr.bf16.mxu0 0
        %515 = vmatpush2.bf16.msra.mxu0 0
        %516 = vmatprep.subr.bf16.mxu0 0
        %517 = vmatpush2.bf16.msra.mxu0 0
        %518 = vmatprep.mubr.bf16.mxu0 0
        %519 = vmatmul.mubr.bf16.gmra.mxu0 %v377
        %v520 = vpop.f32.mrf.mxu0
        %v521 = vadd.f32 %v399, %v520
        %v522 = vpop.f32.mrf.mxu0
        %v523 = vadd.f32 %v403, %v522
        %v524 = vpop.f32.mrf.mxu0
        %v525 = vpop.f32.mrf.mxu0
        %526 = vdwg.mxu0
        %v527 = vpack.c.bf16 %v523, %v523
        %v528 = vlaneseq
        %v529 = vshrl.u32 %v528, 7
        %v530 = vld [vmem:[%s374] sm:$0x1]
        %v531 = vlaneseq
        %v532 = vshrl.u32 %v531, 7
        %v533 = vsub.s32 0, %v532
        %v534 = vrot.slane %v530, %v533
        %vm535 = vcmp.eq.s32.totalorder %v529, %v534
        %v536 = vsel %vm535, 1, 0
        %v537 = vcvt.s32.f32 %v536
        %v538 = vpack.c.bf16 %v537, %v537
        %539 = vxpose.xlu0.c.b16.start [1/8] %v538, 128
        %540 = vxpose.xlu0.c.b16.cont [2/8] 0, 128
        %541 = vxpose.xlu0.c.b16.cont [3/8] 0, 128
        %542 = vxpose.xlu0.c.b16.cont [4/8] 0, 128
        %543 = vxpose.xlu0.c.b16.cont [5/8] 0, 128
        %544 = vxpose.xlu0.c.b16.cont [6/8] 0, 128
        %545 = vxpose.xlu0.c.b16.cont [7/8] 0, 128
        %546 = vxpose.xlu0.c.b16.end [8/8] 0, 128
        %v547 = vpop.trf.xlu0
        %v548 = vpop.trf.xlu0
        %v549 = vpop.trf.xlu0
        %v550 = vpop.trf.xlu0
        %v551 = vpop.trf.xlu0
        %v552 = vpop.trf.xlu0
        %v553 = vpop.trf.xlu0
        %v554 = vpop.trf.xlu0
        %vm555 = vcmask 64512
        %v557 = vsel %vm555, %v547, 0
        %v560 = vsel %vm555, %v548, 0
        %vm562 = vcmask 1043456
        %v564 = vsel %vm562, %v527, 0
        %566 = vmatprep.subr.bf16.mxu0 0
        %567 = vmatpush1.bf16.msra.mxu0 0
        %568 = vmatprep.subr.bf16.mxu0 0
        %569 = vmatpush1.bf16.msra.mxu0 0
        %570 = vmatprep.subr.bf16.mxu0 0
        %571 = vmatpush1.bf16.msra.mxu0 0
        %572 = vmatprep.subr.bf16.mxu0 0
        %573 = vmatpush1.bf16.msra.mxu0 0
        %574 = vmatprep.subr.bf16.mxu0 0
        %575 = vmatpush1.bf16.msra.mxu0 0
        %576 = vmatprep.subr.bf16.mxu0 0
        %577 = vmatpush1.bf16.msra.mxu0 0
        %578 = vmatprep.subr.bf16.mxu0 0
        %579 = vmatpush1.bf16.msra.mxu0 0
        %580 = vmatprep.subr.bf16.mxu0 0
        %581 = vmatpush1.bf16.msra.mxu0 %v564
        %582 = vmatprep.subr.bf16.mxu0 0
        %583 = vmatpush2.bf16.msra.mxu0 0
        %584 = vmatprep.subr.bf16.mxu0 0
        %585 = vmatpush2.bf16.msra.mxu0 0
        %586 = vmatprep.subr.bf16.mxu0 0
        %587 = vmatpush2.bf16.msra.mxu0 0
        %588 = vmatprep.subr.bf16.mxu0 0
        %589 = vmatpush2.bf16.msra.mxu0 0
        %590 = vmatprep.subr.bf16.mxu0 0
        %591 = vmatpush2.bf16.msra.mxu0 0
        %592 = vmatprep.subr.bf16.mxu0 0
        %593 = vmatpush2.bf16.msra.mxu0 0
        %594 = vmatprep.subr.bf16.mxu0 0
        %595 = vmatpush2.bf16.msra.mxu0 0
        %596 = vmatprep.subr.bf16.mxu0 0
        %597 = vmatpush2.bf16.msra.mxu0 0
        %598 = vmatprep.mubr.bf16.mxu0 0
        %599 = vmatmul.mubr.bf16.gmra.mxu0 %v557
        %v600 = vpop.f32.mrf.mxu0
        %v601 = vadd.f32 0.0, %v600
        %v602 = vpop.f32.mrf.mxu0
        %v603 = vpop.f32.mrf.mxu0
        %v604 = vadd.f32 0.0, %v603
        %v605 = vpop.f32.mrf.mxu0
        %606 = vmatprep.mubr.bf16.mxu0 0
        %607 = vmatmul.mubr.bf16.gmra.mxu0 %v560
        %v608 = vpop.f32.mrf.mxu0
        %v609 = vadd.f32 0.0, %v608
        %v610 = vpop.f32.mrf.mxu0
        %v611 = vpop.f32.mrf.mxu0
        %v612 = vadd.f32 0.0, %v611
        %v613 = vpop.f32.mrf.mxu0
        %614 = vdwg.mxu0
        %v615 = vld [vmem:[#allocation8] sm:$0xf]
        %v616 = vld [vmem:[#allocation8 + $0x4] sm:$0xf]
        %v617 = vld [vmem:[#allocation8 + $0x8] sm:$0xf]
        %v618 = vld [vmem:[#allocation8 + $0xc] sm:$0xf]
        %v619 = vld [vmem:[#allocation8 + $0x10] sm:$0xf]
        %v620 = vld [vmem:[#allocation8 + $0x14] sm:$0xf]
        %v621 = vld [vmem:[#allocation8 + $0x18] sm:$0xf]
        %v622 = vld [vmem:[#allocation8 + $0x1c] sm:$0xf]
        %v623 = vld [vmem:[#allocation8 + $0x20] sm:$0xf]
        %v624 = vld [vmem:[#allocation8 + $0x24] sm:$0xf]
        %v625 = vld [vmem:[#allocation8 + $0x28] sm:$0xf]
        %v626 = vld [vmem:[#allocation8 + $0x2c] sm:$0xf]
        %v627 = vld [vmem:[#allocation8 + $0x30] sm:$0xf]
        %v628 = vld [vmem:[#allocation8 + $0x34] sm:$0xf]
        %v629 = vld [vmem:[#allocation8 + $0x38] sm:$0xf]
        %v630 = vld [vmem:[#allocation8 + $0x3c] sm:$0xf]
        %v631 = vld [vmem:[%s6] sm:$0x1]
        %v632 = vld [vmem:[%s325] sm:$0xff]
        %v633 = vpack.c.bf16 %v632, %v632
        %v635 = vlaneseq
        %v636 = vshrl.u32 %v635, 7
        %v637 = vsub.s32 0, %v636
        %v638 = vrot.slane %v631, %v637
        %v656 = vunpack.c.l.b16 %v615
        %v657 = vunpack.c.l.b16 %v616
        %v658 = vunpack.c.l.b16 %v617
        %v659 = vunpack.c.l.b16 %v618
        %v660 = vunpack.c.l.b16 %v619
        %v661 = vunpack.c.l.b16 %v620
        %v662 = vunpack.c.l.b16 %v621
        %v663 = vunpack.c.l.b16 %v622
        %v664 = vunpack.c.l.b16 %v623
        %v665 = vunpack.c.l.b16 %v624
        %v666 = vunpack.c.l.b16 %v625
        %v667 = vunpack.c.l.b16 %v626
        %v668 = vunpack.c.l.b16 %v627
        %v669 = vunpack.c.l.b16 %v628
        %v670 = vunpack.c.l.b16 %v629
        %v671 = vunpack.c.l.b16 %v630
        %v672 = vpack.c.b16 %v657, %v656
        %v673 = vpack.c.b16 %v659, %v658
        %v674 = vpack.c.b16 %v661, %v660
        %v675 = vpack.c.b16 %v663, %v662
        %v676 = vpack.c.b16 %v665, %v664
        %v677 = vpack.c.b16 %v667, %v666
        %v678 = vpack.c.b16 %v669, %v668
        %v679 = vpack.c.b16 %v671, %v670
        %688 = vmatprep.subr.bf16.mxu0 0
        %689 = vmatpush1.bf16.msra.mxu0 %v679
        %690 = vmatprep.subr.bf16.mxu0 0
        %691 = vmatpush1.bf16.msra.mxu0 %v678
        %692 = vmatprep.subr.bf16.mxu0 0
        %693 = vmatpush1.bf16.msra.mxu0 %v677
        %694 = vmatprep.subr.bf16.mxu0 0
        %695 = vmatpush1.bf16.msra.mxu0 %v676
        %696 = vmatprep.subr.bf16.mxu0 0
        %697 = vmatpush1.bf16.msra.mxu0 %v675
        %698 = vmatprep.subr.bf16.mxu0 0
        %699 = vmatpush1.bf16.msra.mxu0 %v674
        %700 = vmatprep.subr.bf16.mxu0 0
        %701 = vmatpush1.bf16.msra.mxu0 %v673
        %702 = vmatprep.subr.bf16.mxu0 0
        %703 = vmatpush1.bf16.msra.mxu0 %v672
        %704 = vmatprep.subr.bf16.mxu0 0
        %705 = vmatpush2.bf16.msra.mxu0 0
        %706 = vmatprep.subr.bf16.mxu0 0
        %707 = vmatpush2.bf16.msra.mxu0 0
        %708 = vmatprep.subr.bf16.mxu0 0
        %709 = vmatpush2.bf16.msra.mxu0 0
        %710 = vmatprep.subr.bf16.mxu0 0
        %711 = vmatpush2.bf16.msra.mxu0 0
        %712 = vmatprep.subr.bf16.mxu0 0
        %713 = vmatpush2.bf16.msra.mxu0 0
        %714 = vmatprep.subr.bf16.mxu0 0
        %715 = vmatpush2.bf16.msra.mxu0 0
        %716 = vmatprep.subr.bf16.mxu0 0
        %717 = vmatpush2.bf16.msra.mxu0 0
        %718 = vmatprep.subr.bf16.mxu0 0
        %719 = vmatpush2.bf16.msra.mxu0 0
        %720 = vmatprep.mubr.bf16.mxu0 0
        %721 = vmatmul.mubr.bf16.gmra.mxu0 %v633
        %v722 = vpop.f32.mrf.mxu0
        %v723 = vadd.f32 %v638, %v722
        %v724 = vpop.f32.mrf.mxu0
        %v725 = vpop.f32.mrf.mxu0
        %v726 = vpop.f32.mrf.mxu0
        %727 = vdwg.mxu0
        %v728 = vld [vmem:[%s325 + $0x8] sm:$0xff]
        %v729 = vpack.c.bf16 %v728, %v728
        %730 = vmatprep.subr.bf16.mxu0 0
        %731 = vmatpush1.bf16.msra.mxu0 %v679
        %732 = vmatprep.subr.bf16.mxu0 0
        %733 = vmatpush1.bf16.msra.mxu0 %v678
        %734 = vmatprep.subr.bf16.mxu0 0
        %735 = vmatpush1.bf16.msra.mxu0 %v677
        %736 = vmatprep.subr.bf16.mxu0 0
        %737 = vmatpush1.bf16.msra.mxu0 %v676
        %738 = vmatprep.subr.bf16.mxu0 0
        %739 = vmatpush1.bf16.msra.mxu0 %v675
        %740 = vmatprep.subr.bf16.mxu0 0
        %741 = vmatpush1.bf16.msra.mxu0 %v674
        %742 = vmatprep.subr.bf16.mxu0 0
        %743 = vmatpush1.bf16.msra.mxu0 %v673
        %744 = vmatprep.subr.bf16.mxu0 0
        %745 = vmatpush1.bf16.msra.mxu0 %v672
        %746 = vmatprep.subr.bf16.mxu0 0
        %747 = vmatpush2.bf16.msra.mxu0 0
        %748 = vmatprep.subr.bf16.mxu0 0
        %749 = vmatpush2.bf16.msra.mxu0 0
        %750 = vmatprep.subr.bf16.mxu0 0
        %751 = vmatpush2.bf16.msra.mxu0 0
        %752 = vmatprep.subr.bf16.mxu0 0
        %753 = vmatpush2.bf16.msra.mxu0 0
        %754 = vmatprep.subr.bf16.mxu0 0
        %755 = vmatpush2.bf16.msra.mxu0 0
        %756 = vmatprep.subr.bf16.mxu0 0
        %757 = vmatpush2.bf16.msra.mxu0 0
        %758 = vmatprep.subr.bf16.mxu0 0
        %759 = vmatpush2.bf16.msra.mxu0 0
        %760 = vmatprep.subr.bf16.mxu0 0
        %761 = vmatpush2.bf16.msra.mxu0 0
        %762 = vmatprep.mubr.bf16.mxu0 0
        %763 = vmatmul.mubr.bf16.gmra.mxu0 %v729
        %v764 = vpop.f32.mrf.mxu0
        %v765 = vadd.f32 %v638, %v764
        %v766 = vpop.f32.mrf.mxu0
        %v767 = vpop.f32.mrf.mxu0
        %v768 = vpop.f32.mrf.mxu0
        %769 = vdwg.mxu0
        %v770 = vmax.f32 %v723, %v765
        %v771 = vsub.f32 %v723, %v770
        %v772 = vmul.f32 %v771, 1.442695
        %v773 = vpow.pop %v772
        %v774 = vsub.f32 %v765, %v770
        %v775 = vmul.f32 %v774, 1.442695
        %v776 = vpow.pop %v775
        %v777 = vadd.f32 %v773, %v776
        %v778 = vmul.f32 %v773, %v601
        %v779 = vmul.f32 %v776, %v604
        %v780 = vadd.f32 %v778, %v779
        %v781 = vld [vmem:[%s325 + $0x10] sm:$0xff]
        %v782 = vpack.c.bf16 %v781, %v781
        %783 = vmatprep.subr.bf16.mxu0 0
        %784 = vmatpush1.bf16.msra.mxu0 %v679
        %785 = vmatprep.subr.bf16.mxu0 0
        %786 = vmatpush1.bf16.msra.mxu0 %v678
        %787 = vmatprep.subr.bf16.mxu0 0
        %788 = vmatpush1.bf16.msra.mxu0 %v677
        %789 = vmatprep.subr.bf16.mxu0 0
        %790 = vmatpush1.bf16.msra.mxu0 %v676
        %791 = vmatprep.subr.bf16.mxu0 0
        %792 = vmatpush1.bf16.msra.mxu0 %v675
        %793 = vmatprep.subr.bf16.mxu0 0
        %794 = vmatpush1.bf16.msra.mxu0 %v674
        %795 = vmatprep.subr.bf16.mxu0 0
        %796 = vmatpush1.bf16.msra.mxu0 %v673
        %797 = vmatprep.subr.bf16.mxu0 0
        %798 = vmatpush1.bf16.msra.mxu0 %v672
        %799 = vmatprep.subr.bf16.mxu0 0
        %800 = vmatpush2.bf16.msra.mxu0 0
        %801 = vmatprep.subr.bf16.mxu0 0
        %802 = vmatpush2.bf16.msra.mxu0 0
        %803 = vmatprep.subr.bf16.mxu0 0
        %804 = vmatpush2.bf16.msra.mxu0 0
        %805 = vmatprep.subr.bf16.mxu0 0
        %806 = vmatpush2.bf16.msra.mxu0 0
        %807 = vmatprep.subr.bf16.mxu0 0
        %808 = vmatpush2.bf16.msra.mxu0 0
        %809 = vmatprep.subr.bf16.mxu0 0
        %810 = vmatpush2.bf16.msra.mxu0 0
        %811 = vmatprep.subr.bf16.mxu0 0
        %812 = vmatpush2.bf16.msra.mxu0 0
        %813 = vmatprep.subr.bf16.mxu0 0
        %814 = vmatpush2.bf16.msra.mxu0 0
        %815 = vmatprep.mubr.bf16.mxu0 0
        %816 = vmatmul.mubr.bf16.gmra.mxu0 %v782
        %v817 = vpop.f32.mrf.mxu0
        %v818 = vadd.f32 %v638, %v817
        %v819 = vpop.f32.mrf.mxu0
        %v820 = vpop.f32.mrf.mxu0
        %v821 = vpop.f32.mrf.mxu0
        %822 = vdwg.mxu0
        %v823 = vmax.f32 %v770, %v818
        %v824 = vsub.f32 %v770, %v823
        %v825 = vmul.f32 %v824, 1.442695
        %v826 = vpow.pop %v825
        %v827 = vsub.f32 %v818, %v823
        %v828 = vmul.f32 %v827, 1.442695
        %v829 = vpow.pop %v828
        %v830 = vmul.f32 %v826, %v777
        %v831 = vadd.f32 %v830, %v829
        %v832 = vmul.f32 %v826, %v780
        %v833 = vmul.f32 %v829, %v609
        %v834 = vadd.f32 %v832, %v833
        %v835 = vld [vmem:[%s325 + $0x18] sm:$0xff]
        %v836 = vpack.c.bf16 %v835, %v835
        %837 = vmatprep.subr.bf16.mxu0 0
        %838 = vmatpush1.bf16.msra.mxu0 %v679
        %839 = vmatprep.subr.bf16.mxu0 0
        %840 = vmatpush1.bf16.msra.mxu0 %v678
        %841 = vmatprep.subr.bf16.mxu0 0
        %842 = vmatpush1.bf16.msra.mxu0 %v677
        %843 = vmatprep.subr.bf16.mxu0 0
        %844 = vmatpush1.bf16.msra.mxu0 %v676
        %845 = vmatprep.subr.bf16.mxu0 0
        %846 = vmatpush1.bf16.msra.mxu0 %v675
        %847 = vmatprep.subr.bf16.mxu0 0
        %848 = vmatpush1.bf16.msra.mxu0 %v674
        %849 = vmatprep.subr.bf16.mxu0 0
        %850 = vmatpush1.bf16.msra.mxu0 %v673
        %851 = vmatprep.subr.bf16.mxu0 0
        %852 = vmatpush1.bf16.msra.mxu0 %v672
        %853 = vmatprep.subr.bf16.mxu0 0
        %854 = vmatpush2.bf16.msra.mxu0 0
        %855 = vmatprep.subr.bf16.mxu0 0
        %856 = vmatpush2.bf16.msra.mxu0 0
        %857 = vmatprep.subr.bf16.mxu0 0
        %858 = vmatpush2.bf16.msra.mxu0 0
        %859 = vmatprep.subr.bf16.mxu0 0
        %860 = vmatpush2.bf16.msra.mxu0 0
        %861 = vmatprep.subr.bf16.mxu0 0
        %862 = vmatpush2.bf16.msra.mxu0 0
        %863 = vmatprep.subr.bf16.mxu0 0
        %864 = vmatpush2.bf16.msra.mxu0 0
        %865 = vmatprep.subr.bf16.mxu0 0
        %866 = vmatpush2.bf16.msra.mxu0 0
        %867 = vmatprep.subr.bf16.mxu0 0
        %868 = vmatpush2.bf16.msra.mxu0 0
        %869 = vmatprep.mubr.bf16.mxu0 0
        %870 = vmatmul.mubr.bf16.gmra.mxu0 %v836
        %v871 = vpop.f32.mrf.mxu0
        %v872 = vadd.f32 %v638, %v871
        %v873 = vpop.f32.mrf.mxu0
        %v874 = vpop.f32.mrf.mxu0
        %v875 = vpop.f32.mrf.mxu0
        %876 = vdwg.mxu0
        %v877 = vmax.f32 %v823, %v872
        %v878 = vsub.f32 %v823, %v877
        %v879 = vmul.f32 %v878, 1.442695
        %v880 = vpow.pop %v879
        %v881 = vsub.f32 %v872, %v877
        %v882 = vmul.f32 %v881, 1.442695
        %v883 = vpow.pop %v882
        %v884 = vmul.f32 %v880, %v831
        %v885 = vadd.f32 %v884, %v883
        %v886 = vmul.f32 %v880, %v834
        %v887 = vmul.f32 %v883, %v612
        %v888 = vadd.f32 %v886, %v887
        %v889 = vrcp.pop %v885
        %v890 = vmul.f32 %v888, %v889
        %v891 = vadd.f32 %v521, %v890
        %892 = vst [vmem:[%s371] sm:$0xff] %v891
        %s893 = sand.u32 %s198, 1
        %s894 = scalar_lea.sflag [#allocation4], %s893
        %s895 = sand.u32 %s198, 1
        %s896 = smul.addr %s895, 8
        %s897 = scalar_lea.vmem [#allocation10], %s896
        // Predicated region
        $region65: #{tpu_custom_call.1} parent=47 // pred_check
          %p898 = pneg %p208
        $region66: #{tpu_custom_call.1} parent=47 // pred_check_branch
          %900 = sbr.rel (%p898) target = $region68
        $region67: #{tpu_custom_call.1} parent=47 // pred_region
          %s902 = ssub.s32 128, 128
          %903 = vsyncadd %s894, %s902
          %s904 = smul.addr %s28, 128
          %s905 = scalar_lea.hbm %s7, %s904
          %s907 = sshll.u32 %s897, 4
          %s908 = int_to_ptr.vmem [resolvable:$true] %s907
          %910 = dma.vmem_to_hbm [thread:$0]  %s908, 128, %s905, %s894
        $region68: #{tpu_custom_call.1} parent=47 // pred_fallthru
          _
      $region48: #{tpu_custom_call.1} parent=5 // pred_fallthru
        _
      %p911 = scmp.le.s32.totalorder 2, %s23
      // Predicated region
      $region69: #{tpu_custom_call.1} parent=5 // pred_check
        %p912 = pneg %p911
      $region70: #{tpu_custom_call.1} parent=5 // pred_check_branch
        %914 = sbr.rel (%p912) target = $region72
      $region71: #{tpu_custom_call.1} parent=5 // pred_region
        %s915 = ssub.s32 %s23, 2
        // Predicated region
        $region73: #{tpu_custom_call.1} parent=71 // pred_check
          %p916 = pneg %p214
        $region74: #{tpu_custom_call.1} parent=71 // pred_check_branch
          %918 = sbr.rel (%p916) target = $region76
        $region75: #{tpu_custom_call.1} parent=71 // pred_region
          %s919 = sand.u32 %s199, 1
          %s920 = scalar_lea.sflag [#allocation4], %s919
          %s921 = sand.u32 %s199, 1
          %s922 = smul.addr %s921, 8
          %s923 = scalar_lea.vmem [#allocation10], %s922
          %924 = dma.done %s920, 128
        $region76: #{tpu_custom_call.1} parent=71 // pred_fallthru
          _
      $region72: #{tpu_custom_call.1} parent=5 // pred_fallthru
        _
    $region6: #{tpu_custom_call.1} parent=1 // loop_footer
      %s27 = sadd.s32 1, %s23
    $region7: #{tpu_custom_call.1} parent=1 // loop_footer_branch
      %22 = sbr.rel target = $region3
    $region8: #{tpu_custom_call.1} parent=1 // loop_exit
      _
    %925 = vsyncpa [#allocation3], 1
    %s926 = scalar_lea.sflag [#allocation3], 1
    %927 = vsyncpa %s926, 1
    %928 = vsyncpa [#allocation6], 1
    %s929 = scalar_lea.sflag [#allocation6], 1
    %930 = vsyncpa %s929, 1
    %931 = vsyncpa [#allocation9], 1
    %932 = vsyncpa [#allocation4], 1
    %s933 = scalar_lea.sflag [#allocation4], 1
    %934 = vsyncpa %s933, 1

</llo_original>
